<compile_context>
chip_gen: v7x
topology: tpu7x:2x2x1
jax: 0.10.0
libtpu: 0.0.40
codegen_flags: <defaults>
</compile_context>

<pallas_src>
import functools

import jax
import jax.numpy as jnp
from jax.experimental import pallas as pl
from jax.experimental.pallas import tpu as pltpu


def _coordpool_kernel(x_ref, xh_ref, xw_ref, *, kh, kw):
    """One (H, W, TB) channels-last slab per grid step.

    x_ref : (H, W, TB)
    xh_ref: (H, W - kh + 1, TB)   mean over a sliding width-window of size kh
    xw_ref: (H - kw + 1, W, TB)   mean over a sliding height-window of size kw
                                  (untransposed; wrapper applies the permute)
    """
    x = x_ref[...]
    H, W, _ = x.shape
    w_out = W - kh + 1
    h_out = H - kw + 1

    xf = x if x.dtype == jnp.float32 else x.astype(jnp.float32)

    # ---- horizontal pooling: kernel (1, kh), window slides along W ----------
    if kh == W:
        # Classic CoordPooling usage: full-width window -> single reduce.
        xh = jnp.mean(xf, axis=1, keepdims=True)                 # (H, 1, TB)
    else:
        acc = xf[:, 0:w_out, :]
        for k in range(1, kh):                                   # static unroll
            acc = acc + xf[:, k:k + w_out, :]
        xh = acc * (1.0 / kh)
    xh_ref[...] = xh.astype(xh_ref.dtype)

    # ---- vertical pooling: kernel (kw, 1), window slides along H ------------
    if kw == H:
        xw = jnp.mean(xf, axis=0, keepdims=True)                 # (1, W, TB)
    else:
        acc = xf[0:h_out, :, :]
        for k in range(1, kw):                                   # static unroll
            acc = acc + xf[k:k + h_out, :, :]
        xw = acc * (1.0 / kw)
    xw_ref[...] = xw.astype(xw_ref.dtype)


def _pick_tb(H, W, w_out, h_out, nc, itemsize, budget_bytes):
    """Channel-tile width (lane axis). Multiple of 128 or the full N*C axis."""
    # input block + both output blocks, double-buffered by the pipeline
    per_lane = (H * W + H * w_out + h_out * W) * itemsize * 2
    max_tb = max(1, budget_bytes // per_lane)
    if nc <= max_tb:
        if nc > 256:
            # Split into >=2 blocks so the parallel grid axis can shard across
            # v7x's 2 TensorCores (near-zero cost on 1-TC v5e/v6e).
            tb = -(-(-(-nc // 2)) // 128) * 128
            if 0 < tb < nc:
                return tb
        return nc                       # full lane axis in one block (always legal)
    tb = (max_tb // 128) * 128          # multiple of 128 -> legal partial-edge tiling
    if tb == 0:
        tb = 128 if nc >= 128 else nc   # huge spatial plane: minimum lane-dense tile
    return tb


def coord_pooling(x, h, w):
    """x: (N, C, H, W).  Returns (x_h, x_w) matching the PyTorch module."""
    N, C, H, W = x.shape
    kh, kw = h, w
    assert kh <= W and kw <= H, "pooling window must fit inside the input"
    w_out = W - kh + 1
    h_out = H - kw + 1
    nc = N * C
    itemsize = jnp.dtype(x.dtype).itemsize

    # Channels-last: put N*C on the 128-lane axis (lane-dense loads/stores).
    x_cl = jnp.transpose(x.reshape(nc, H, W), (1, 2, 0))         # (H, W, NC)

    budget = 12 << 20                                            # fits v5e/v6e/v7x
    tb = _pick_tb(H, W, w_out, h_out, nc, itemsize, budget)
    grid = (pl.cdiv(nc, tb),)

    required = (H * W + H * w_out + h_out * W) * itemsize * 2 * tb
    vmem_limit = max(32 << 20, required + (4 << 20))             # explicit, with headroom

    xh_cl, xw_cl = pl.pallas_call(
        functools.partial(_coordpool_kernel, kh=kh, kw=kw),
        out_shape=(
            jax.ShapeDtypeStruct((H, w_out, nc), x.dtype),
            jax.ShapeDtypeStruct((h_out, W, nc), x.dtype),
        ),
        grid=grid,
        in_specs=[pl.BlockSpec((H, W, tb), lambda i: (0, 0, i))],
        out_specs=(
            pl.BlockSpec((H, w_out, tb), lambda i: (0, 0, i)),
            pl.BlockSpec((h_out, W, tb), lambda i: (0, 0, i)),
        ),
        compiler_params=pltpu.CompilerParams(
            dimension_semantics=("parallel",),
            vmem_limit_bytes=int(vmem_limit),
        ),
    )(x_cl)

    # Undo the channels-last layout outside the kernel (pure layout plumbing).
    x_h = jnp.transpose(xh_cl, (2, 0, 1)).reshape(N, C, H, w_out)
    # xw_cl[i, j, nc] = mean_k x[nc, i+k, j]; PyTorch wants (N, C, W, h_out)
    x_w = jnp.transpose(xw_cl, (2, 1, 0)).reshape(N, C, W, h_out)
    return x_h, x_w


def _reference(x, h, w):
    """Pure-JAX reference of the PyTorch forward."""
    N, C, H, W = x.shape
    w_out = W - h + 1
    h_out = H - w + 1
    xh = jnp.mean(
        jnp.stack([x[:, :, :, k:k + w_out] for k in range(h)], axis=0), axis=0)
    xw = jnp.mean(
        jnp.stack([x[:, :, k:k + h_out, :] for k in range(w)], axis=0), axis=0)
    xw = jnp.transpose(xw, (0, 1, 3, 2))
    return xh, xw


if __name__ == "__main__":
    key = jax.random.PRNGKey(0)
    N, C, H, W = 2, 4, 16, 16
    x = jax.random.normal(key, (N, C, H, W), dtype=jnp.float32)

    # Classic coordinate-attention usage: full-window pooling (h = W, w = H).
    h, w = W, H
    x_h, x_w = coord_pooling(x, h, w)
    jax.block_until_ready((x_h, x_w))
    ref_h, ref_w = _reference(x, h, w)
    assert x_h.shape == (N, C, H, W - h + 1)
    assert x_w.shape == (N, C, W, H - w + 1)
    assert jnp.allclose(x_h, ref_h, atol=1e-5, rtol=1e-5)
    assert jnp.allclose(x_w, ref_w, atol=1e-5, rtol=1e-5)

    # General sliding-window path (exercises the shift-add branch).
    h2, w2 = 5, 3
    x_h2, x_w2 = coord_pooling(x, h2, w2)
    jax.block_until_ready((x_h2, x_w2))
    ref_h2, ref_w2 = _reference(x, h2, w2)
    assert x_h2.shape == (N, C, H, W - h2 + 1)
    assert x_w2.shape == (N, C, W, H - w2 + 1)
    assert jnp.allclose(x_h2, ref_h2, atol=1e-5, rtol=1e-5)
    assert jnp.allclose(x_w2, ref_w2, atol=1e-5, rtol=1e-5)

    print("KERNEL_OK")
</pallas_src>

<mosaic_0001>
module attributes {stable_mosaic.version = 11 : i64} {
  func.func @_coordpool_kernel(%arg0: i32, %arg1: memref<16x16x8xf32, #tpu.memory_space<vmem>>, %arg2: memref<16x1x8xf32, #tpu.memory_space<vmem>>, %arg3: memref<1x16x8xf32, #tpu.memory_space<vmem>>) attributes {dimension_semantics = [#tpu.dimension_semantics<parallel>], iteration_bounds = array<i64: 1>, scalar_prefetch = 0 : i64, scratch_operands = 0 : i64, tpu.core_type = #tpu.core_type<tc>, window_params = [{transform_indices = @transform_0, window_bounds = array<i64: 16, 16, 8>}, {transform_indices = @transform_1, window_bounds = array<i64: 16, 1, 8>}, {transform_indices = @transform_2, window_bounds = array<i64: 1, 16, 8>}]} {
    %c0 = arith.constant 0 : index
    %c0_0 = arith.constant 0 : index
    %c0_1 = arith.constant 0 : index
    %0 = vector.load %arg1[%c0, %c0_0, %c0_1] : memref<16x16x8xf32, #tpu.memory_space<vmem>>, vector<16x16x8xf32>
    %cst = arith.constant dense<0.000000e+00> : vector<16x8xf32>
    %1 = vector.multi_reduction <add>, %0, %cst [1] : vector<16x16x8xf32> to vector<16x8xf32>
    %2 = vector.shape_cast %1 : vector<16x8xf32> to vector<16x1x8xf32>
    %cst_2 = arith.constant 1.600000e+01 : f32
    %3 = vector.broadcast %cst_2 : f32 to vector<16x1x8xf32>
    %4 = arith.divf %2, %3 : vector<16x1x8xf32>
    %c0_3 = arith.constant 0 : index
    %c0_4 = arith.constant 0 : index
    %c0_5 = arith.constant 0 : index
    %5 = vector.load %arg2[%c0_3, %c0_4, %c0_5] : memref<16x1x8xf32, #tpu.memory_space<vmem>>, vector<16x1x8xf32>
    tpu.vector_store %arg2[%c0_3, %c0_4, %c0_5], %4 {strides = array<i32>} : memref<16x1x8xf32, #tpu.memory_space<vmem>>, vector<16x1x8xf32>,
    %cst_6 = arith.constant dense<0.000000e+00> : vector<16x8xf32>
    %6 = vector.multi_reduction <add>, %0, %cst_6 [0] : vector<16x16x8xf32> to vector<16x8xf32>
    %7 = vector.shape_cast %6 : vector<16x8xf32> to vector<1x16x8xf32>
    %cst_7 = arith.constant 1.600000e+01 : f32
    %8 = vector.broadcast %cst_7 : f32 to vector<1x16x8xf32>
    %9 = arith.divf %7, %8 : vector<1x16x8xf32>
    %c0_8 = arith.constant 0 : index
    %c0_9 = arith.constant 0 : index
    %c0_10 = arith.constant 0 : index
    %10 = vector.load %arg3[%c0_8, %c0_9, %c0_10] : memref<1x16x8xf32, #tpu.memory_space<vmem>>, vector<1x16x8xf32>
    tpu.vector_store %arg3[%c0_8, %c0_9, %c0_10], %9 {strides = array<i32>} : memref<1x16x8xf32, #tpu.memory_space<vmem>>, vector<1x16x8xf32>,
    return
  }
  func.func @transform_0(%arg0: i32) -> (i32, i32, i32) {
    %c0_i32 = arith.constant 0 : i32
    %c0_i32_0 = arith.constant 0 : i32
    %c0_i32_1 = arith.constant 0 : i32
    return %c0_i32, %c0_i32_0, %arg0 : i32, i32, i32
  }
  func.func @transform_1(%arg0: i32) -> (i32, i32, i32) {
    %c0_i32 = arith.constant 0 : i32
    %c0_i32_0 = arith.constant 0 : i32
    %c0_i32_1 = arith.constant 0 : i32
    return %c0_i32, %c0_i32_0, %arg0 : i32, i32, i32
  }
  func.func @transform_2(%arg0: i32) -> (i32, i32, i32) {
    %c0_i32 = arith.constant 0 : i32
    %c0_i32_0 = arith.constant 0 : i32
    %c0_i32_1 = arith.constant 0 : i32
    return %c0_i32, %c0_i32_0, %arg0 : i32, i32, i32
  }
}

</mosaic_0001>

<llo_original>
// kernel: tpu_custom_call.1
$region0: #{tpu_custom_call.1}
  #allocation0 [shape = 'u32[]', space=smem, size = 0x4, offset = 0x4, fixed_abs, tag = 'smem constant byte address 0x4 - core index']
  #allocation1 [shape = 'u32[144,128]{1,0:T(1,128)}', space=vmem, size = 0x12000, scoped, tag = 'internal scratch']
  %s0 = inlined_call_operand.vmem [shape: f32[16,16,8], index: 0, kind: input, shape index: {}]
  %s1 = inlined_call_operand.vmem [shape: f32[16,1,8], index: 1, kind: output, shape index: {0}]
  %s2 = inlined_call_operand.vmem [shape: f32[1,16,8], index: 2, kind: output, shape index: {1}]
  %3 = xla_tuple %s1, %s2
  %s4 = sld [smem:[#allocation0]]
  $region22: #{tpu_custom_call.1} parent=0
    _
  %s6 = ssub.s32 1, %s4
  %s7 = scalar_select 0, %s6, %s4
  // Predicated region
  $region2: #{tpu_custom_call.1} parent=0 // pred_check
    _
  $region3: #{tpu_custom_call.1} parent=0 // pred_check_branch
    %9 = sbr.rel (0) target = $region5
  $region4: #{tpu_custom_call.1} parent=0 // pred_region
    _
  $region5: #{tpu_custom_call.1} parent=0 // pred_fallthru
    _
  %v10 = vld [vmem:[%s0] sm:$0xff]
  %v11 = vld [vmem:[%s0 + $0x8] sm:$0xff]
  %v12 = vld [vmem:[%s0 + $0x10] sm:$0xff]
  %v13 = vld [vmem:[%s0 + $0x18] sm:$0xff]
  %v14 = vld [vmem:[%s0 + $0x20] sm:$0xff]
  %v15 = vld [vmem:[%s0 + $0x28] sm:$0xff]
  %v16 = vld [vmem:[%s0 + $0x30] sm:$0xff]
  %v17 = vld [vmem:[%s0 + $0x38] sm:$0xff]
  %v18 = vld [vmem:[%s0 + $0x40] sm:$0xff]
  %v19 = vld [vmem:[%s0 + $0x48] sm:$0xff]
  %v20 = vld [vmem:[%s0 + $0x50] sm:$0xff]
  %v21 = vld [vmem:[%s0 + $0x58] sm:$0xff]
  %v22 = vld [vmem:[%s0 + $0x60] sm:$0xff]
  %v23 = vld [vmem:[%s0 + $0x68] sm:$0xff]
  %v24 = vld [vmem:[%s0 + $0x70] sm:$0xff]
  %v25 = vld [vmem:[%s0 + $0x78] sm:$0xff]
  %v26 = vld [vmem:[%s0 + $0x80] sm:$0xff]
  %v27 = vld [vmem:[%s0 + $0x88] sm:$0xff]
  %v28 = vld [vmem:[%s0 + $0x90] sm:$0xff]
  %v29 = vld [vmem:[%s0 + $0x98] sm:$0xff]
  %v30 = vld [vmem:[%s0 + $0xa0] sm:$0xff]
  %v31 = vld [vmem:[%s0 + $0xa8] sm:$0xff]
  %v32 = vld [vmem:[%s0 + $0xb0] sm:$0xff]
  %v33 = vld [vmem:[%s0 + $0xb8] sm:$0xff]
  %v34 = vld [vmem:[%s0 + $0xc0] sm:$0xff]
  %v35 = vld [vmem:[%s0 + $0xc8] sm:$0xff]
  %v36 = vld [vmem:[%s0 + $0xd0] sm:$0xff]
  %v37 = vld [vmem:[%s0 + $0xd8] sm:$0xff]
  %v38 = vld [vmem:[%s0 + $0xe0] sm:$0xff]
  %v39 = vld [vmem:[%s0 + $0xe8] sm:$0xff]
  %v40 = vld [vmem:[%s0 + $0xf0] sm:$0xff]
  %v41 = vld [vmem:[%s0 + $0xf8] sm:$0xff]
  %vm42 = vcmask 64512
  %v43 = vsel %vm42, %v10, 0.0
  %v44 = vsel %vm42, %v11, 0.0
  %v45 = vadd.f32 %v43, %v44
  %v46 = vrot.slane %v45, 4
  %v47 = vadd.f32 %v45, %v46
  %v48 = vrot.slane %v47, 2
  %v49 = vadd.f32 %v47, %v48
  %v50 = vrot.slane %v49, 1
  %v51 = vadd.f32 %v49, %v50
  %v52 = vsel %vm42, %v12, 0.0
  %v53 = vsel %vm42, %v13, 0.0
  %v54 = vadd.f32 %v52, %v53
  %v55 = vrot.slane %v54, 4
  %v56 = vadd.f32 %v54, %v55
  %v57 = vrot.slane %v56, 2
  %v58 = vadd.f32 %v56, %v57
  %v59 = vrot.slane %v58, 1
  %v60 = vadd.f32 %v58, %v59
  %v61 = vsel %vm42, %v14, 0.0
  %v62 = vsel %vm42, %v15, 0.0
  %v63 = vadd.f32 %v61, %v62
  %v64 = vrot.slane %v63, 4
  %v65 = vadd.f32 %v63, %v64
  %v66 = vrot.slane %v65, 2
  %v67 = vadd.f32 %v65, %v66
  %v68 = vrot.slane %v67, 1
  %v69 = vadd.f32 %v67, %v68
  %v70 = vsel %vm42, %v16, 0.0
  %v71 = vsel %vm42, %v17, 0.0
  %v72 = vadd.f32 %v70, %v71
  %v73 = vrot.slane %v72, 4
  %v74 = vadd.f32 %v72, %v73
  %v75 = vrot.slane %v74, 2
  %v76 = vadd.f32 %v74, %v75
  %v77 = vrot.slane %v76, 1
  %v78 = vadd.f32 %v76, %v77
  %v79 = vsel %vm42, %v18, 0.0
  %v80 = vsel %vm42, %v19, 0.0
  %v81 = vadd.f32 %v79, %v80
  %v82 = vrot.slane %v81, 4
  %v83 = vadd.f32 %v81, %v82
  %v84 = vrot.slane %v83, 2
  %v85 = vadd.f32 %v83, %v84
  %v86 = vrot.slane %v85, 1
  %v87 = vadd.f32 %v85, %v86
  %v88 = vsel %vm42, %v20, 0.0
  %v89 = vsel %vm42, %v21, 0.0
  %v90 = vadd.f32 %v88, %v89
  %v91 = vrot.slane %v90, 4
  %v92 = vadd.f32 %v90, %v91
  %v93 = vrot.slane %v92, 2
  %v94 = vadd.f32 %v92, %v93
  %v95 = vrot.slane %v94, 1
  %v96 = vadd.f32 %v94, %v95
  %v97 = vsel %vm42, %v22, 0.0
  %v98 = vsel %vm42, %v23, 0.0
  %v99 = vadd.f32 %v97, %v98
  %v100 = vrot.slane %v99, 4
  %v101 = vadd.f32 %v99, %v100
  %v102 = vrot.slane %v101, 2
  %v103 = vadd.f32 %v101, %v102
  %v104 = vrot.slane %v103, 1
  %v105 = vadd.f32 %v103, %v104
  %v106 = vsel %vm42, %v24, 0.0
  %v107 = vsel %vm42, %v25, 0.0
  %v108 = vadd.f32 %v106, %v107
  %v109 = vrot.slane %v108, 4
  %v110 = vadd.f32 %v108, %v109
  %v111 = vrot.slane %v110, 2
  %v112 = vadd.f32 %v110, %v111
  %v113 = vrot.slane %v112, 1
  %v114 = vadd.f32 %v112, %v113
  %v115 = vsel %vm42, %v26, 0.0
  %v116 = vsel %vm42, %v27, 0.0
  %v117 = vadd.f32 %v115, %v116
  %v118 = vrot.slane %v117, 4
  %v119 = vadd.f32 %v117, %v118
  %v120 = vrot.slane %v119, 2
  %v121 = vadd.f32 %v119, %v120
  %v122 = vrot.slane %v121, 1
  %v123 = vadd.f32 %v121, %v122
  %v124 = vsel %vm42, %v28, 0.0
  %v125 = vsel %vm42, %v29, 0.0
  %v126 = vadd.f32 %v124, %v125
  %v127 = vrot.slane %v126, 4
  %v128 = vadd.f32 %v126, %v127
  %v129 = vrot.slane %v128, 2
  %v130 = vadd.f32 %v128, %v129
  %v131 = vrot.slane %v130, 1
  %v132 = vadd.f32 %v130, %v131
  %v133 = vsel %vm42, %v30, 0.0
  %v134 = vsel %vm42, %v31, 0.0
  %v135 = vadd.f32 %v133, %v134
  %v136 = vrot.slane %v135, 4
  %v137 = vadd.f32 %v135, %v136
  %v138 = vrot.slane %v137, 2
  %v139 = vadd.f32 %v137, %v138
  %v140 = vrot.slane %v139, 1
  %v141 = vadd.f32 %v139, %v140
  %v142 = vsel %vm42, %v32, 0.0
  %v143 = vsel %vm42, %v33, 0.0
  %v144 = vadd.f32 %v142, %v143
  %v145 = vrot.slane %v144, 4
  %v146 = vadd.f32 %v144, %v145
  %v147 = vrot.slane %v146, 2
  %v148 = vadd.f32 %v146, %v147
  %v149 = vrot.slane %v148, 1
  %v150 = vadd.f32 %v148, %v149
  %v151 = vsel %vm42, %v34, 0.0
  %v152 = vsel %vm42, %v35, 0.0
  %v153 = vadd.f32 %v151, %v152
  %v154 = vrot.slane %v153, 4
  %v155 = vadd.f32 %v153, %v154
  %v156 = vrot.slane %v155, 2
  %v157 = vadd.f32 %v155, %v156
  %v158 = vrot.slane %v157, 1
  %v159 = vadd.f32 %v157, %v158
  %v160 = vsel %vm42, %v36, 0.0
  %v161 = vsel %vm42, %v37, 0.0
  %v162 = vadd.f32 %v160, %v161
  %v163 = vrot.slane %v162, 4
  %v164 = vadd.f32 %v162, %v163
  %v165 = vrot.slane %v164, 2
  %v166 = vadd.f32 %v164, %v165
  %v167 = vrot.slane %v166, 1
  %v168 = vadd.f32 %v166, %v167
  %v169 = vsel %vm42, %v38, 0.0
  %v170 = vsel %vm42, %v39, 0.0
  %v171 = vadd.f32 %v169, %v170
  %v172 = vrot.slane %v171, 4
  %v173 = vadd.f32 %v171, %v172
  %v174 = vrot.slane %v173, 2
  %v175 = vadd.f32 %v173, %v174
  %v176 = vrot.slane %v175, 1
  %v177 = vadd.f32 %v175, %v176
  %v178 = vsel %vm42, %v40, 0.0
  %v179 = vsel %vm42, %v41, 0.0
  %v180 = vadd.f32 %v178, %v179
  %v181 = vrot.slane %v180, 4
  %v182 = vadd.f32 %v180, %v181
  %v183 = vrot.slane %v182, 2
  %v184 = vadd.f32 %v182, %v183
  %v185 = vrot.slane %v184, 1
  %v186 = vadd.f32 %v184, %v185
  %v187 = vrcp.pop 16.0
  %v188 = vmul.f32 %v51, %v187
  %v189 = vmul.f32 %v60, %v187
  %v190 = vmul.f32 %v69, %v187
  %v191 = vmul.f32 %v78, %v187
  %v192 = vmul.f32 %v87, %v187
  %v193 = vmul.f32 %v96, %v187
  %v194 = vmul.f32 %v105, %v187
  %v195 = vmul.f32 %v114, %v187
  %v196 = vmul.f32 %v123, %v187
  %v197 = vmul.f32 %v132, %v187
  %v198 = vmul.f32 %v141, %v187
  %v199 = vmul.f32 %v150, %v187
  %v200 = vmul.f32 %v159, %v187
  %v201 = vmul.f32 %v168, %v187
  %v202 = vmul.f32 %v177, %v187
  %v203 = vmul.f32 %v186, %v187
  %vm204 = vcmask 57344
  %205 = vst.msk [vmem:[%s1] sm:$0x1] %vm204, %v188
  %206 = vst.msk [vmem:[%s1 + $0x1] sm:$0x1] %vm204, %v189
  %207 = vst.msk [vmem:[%s1 + $0x2] sm:$0x1] %vm204, %v190
  %208 = vst.msk [vmem:[%s1 + $0x3] sm:$0x1] %vm204, %v191
  %209 = vst.msk [vmem:[%s1 + $0x4] sm:$0x1] %vm204, %v192
  %210 = vst.msk [vmem:[%s1 + $0x5] sm:$0x1] %vm204, %v193
  %211 = vst.msk [vmem:[%s1 + $0x6] sm:$0x1] %vm204, %v194
  %212 = vst.msk [vmem:[%s1 + $0x7] sm:$0x1] %vm204, %v195
  %213 = vst.msk [vmem:[%s1 + $0x8] sm:$0x1] %vm204, %v196
  %214 = vst.msk [vmem:[%s1 + $0x9] sm:$0x1] %vm204, %v197
  %215 = vst.msk [vmem:[%s1 + $0xa] sm:$0x1] %vm204, %v198
  %216 = vst.msk [vmem:[%s1 + $0xb] sm:$0x1] %vm204, %v199
  %217 = vst.msk [vmem:[%s1 + $0xc] sm:$0x1] %vm204, %v200
  %218 = vst.msk [vmem:[%s1 + $0xd] sm:$0x1] %vm204, %v201
  %219 = vst.msk [vmem:[%s1 + $0xe] sm:$0x1] %vm204, %v202
  %220 = vst.msk [vmem:[%s1 + $0xf] sm:$0x1] %vm204, %v203
  %v221 = vadd.f32 %v43, %v52
  %v222 = vadd.f32 %v221, %v61
  %v223 = vadd.f32 %v222, %v70
  %v224 = vadd.f32 %v223, %v79
  %v225 = vadd.f32 %v224, %v88
  %v226 = vadd.f32 %v225, %v97
  %v227 = vadd.f32 %v226, %v106
  %v228 = vadd.f32 %v227, %v115
  %v229 = vadd.f32 %v228, %v124
  %v230 = vadd.f32 %v229, %v133
  %v231 = vadd.f32 %v230, %v142
  %v232 = vadd.f32 %v231, %v151
  %v233 = vadd.f32 %v232, %v160
  %v234 = vadd.f32 %v233, %v169
  %v235 = vadd.f32 %v234, %v178
  %v236 = vadd.f32 %v44, %v53
  %v237 = vadd.f32 %v236, %v62
  %v238 = vadd.f32 %v237, %v71
  %v239 = vadd.f32 %v238, %v80
  %v240 = vadd.f32 %v239, %v89
  %v241 = vadd.f32 %v240, %v98
  %v242 = vadd.f32 %v241, %v107
  %v243 = vadd.f32 %v242, %v116
  %v244 = vadd.f32 %v243, %v125
  %v245 = vadd.f32 %v244, %v134
  %v246 = vadd.f32 %v245, %v143
  %v247 = vadd.f32 %v246, %v152
  %v248 = vadd.f32 %v247, %v161
  %v249 = vadd.f32 %v248, %v170
  %v250 = vadd.f32 %v249, %v179
  %v251 = vmul.f32 %v235, %v187
  %v252 = vmul.f32 %v250, %v187
  %253 = vst.msk [vmem:[%s2] sm:$0xff] %vm42, %v251
  %254 = vst.msk [vmem:[%s2 + $0x8] sm:$0xff] %vm42, %v252
  // Predicated region
  $region6: #{tpu_custom_call.1} parent=0 // pred_check
    _
  $region7: #{tpu_custom_call.1} parent=0 // pred_check_branch
    %256 = sbr.rel (0) target = $region9
  $region8: #{tpu_custom_call.1} parent=0 // pred_region
    _
  $region9: #{tpu_custom_call.1} parent=0 // pred_fallthru
    _
  // Predicated region
  $region10: #{tpu_custom_call.1} parent=0 // pred_check
    _
  $region11: #{tpu_custom_call.1} parent=0 // pred_check_branch
    %258 = sbr.rel (0) target = $region13
  $region12: #{tpu_custom_call.1} parent=0 // pred_region
    _
  $region13: #{tpu_custom_call.1} parent=0 // pred_fallthru
    _
  // Predicated region
  $region14: #{tpu_custom_call.1} parent=0 // pred_check
    _
  $region15: #{tpu_custom_call.1} parent=0 // pred_check_branch
    %260 = sbr.rel (0) target = $region17
  $region16: #{tpu_custom_call.1} parent=0 // pred_region
    _
  $region17: #{tpu_custom_call.1} parent=0 // pred_fallthru
    _
  // Predicated region
  $region18: #{tpu_custom_call.1} parent=0 // pred_check
    _
  $region19: #{tpu_custom_call.1} parent=0 // pred_check_branch
    %262 = sbr.rel (0) target = $region21
  $region20: #{tpu_custom_call.1} parent=0 // pred_region
    _
  $region21: #{tpu_custom_call.1} parent=0 // pred_fallthru
    _

</llo_original>
